<compile_context>
chip_gen: v5e
topology: v5e:2x2
jax: 0.10.0
libtpu: 0.0.40
codegen_flags: <defaults>
</compile_context>

<pallas_src>
import math

import jax
import jax.numpy as jnp
from jax.experimental import pallas as pl
from jax.experimental.pallas import tpu as pltpu

LANE = 128            # vreg lane width; padded hidden / action width
MAX_BATCH_TILE = 512  # tile cap: keeps f32 intermediates comfortably in vregs/VMEM


def _round_up(n, m):
    return ((n + m - 1) // m) * m


def qnetwork_kernel(x_ref, w1_ref, w2_ref, w3_ref, bias_ref, out_ref):
    """One batch tile: 3 MXU matmuls (bf16 operands, f32 accum) + f32 bias/ReLU."""
    x = x_ref[...]                      # (TB, S) bf16 (pre-cast outside)
    b = bias_ref[...]                   # (8, 128) f32; rows 0..2 are b1, b2, b3
    h1 = jnp.dot(x, w1_ref[...], preferred_element_type=jnp.float32)        # (TB, 128)
    h1 = jnp.maximum(h1 + b[0:1, :], 0.0)
    h2 = jnp.dot(h1.astype(jnp.bfloat16), w2_ref[...],
                 preferred_element_type=jnp.float32)                        # (TB, 128)
    h2 = jnp.maximum(h2 + b[1:2, :], 0.0)
    q = jnp.dot(h2.astype(jnp.bfloat16), w3_ref[...],
                preferred_element_type=jnp.float32)                         # (TB, 128)
    out_ref[...] = (q + b[2:3, :]).astype(out_ref.dtype)                    # lane-dense store


def qnetwork_forward(x, padded_params, action_size, *, out_dtype=jnp.float32):
    """Lane-dense, adaptively batch-tiled forward pass. Returns (B, action_size) f32."""
    w1p, w2p, w3p, b_packed = padded_params
    B, S = x.shape
    H = w1p.shape[1]  # 128: lane-padded hidden / action width

    # Adaptive batch tiling: one grid step if the batch fits in one <=512-row
    # tile; otherwise the fewest tiles of <=MAX_BATCH_TILE rows (16-row aligned
    # for bf16 sublane packing).
    if B <= MAX_BATCH_TILE:
        num_tiles = 1
        batch_tile = _round_up(max(B, 16), 16)
    else:
        num_tiles = pl.cdiv(B, MAX_BATCH_TILE)
        batch_tile = _round_up(pl.cdiv(B, num_tiles), 16)
    Bp = num_tiles * batch_tile

    if Bp != B:
        x = jnp.pad(x, ((0, Bp - B), (0, 0)))
    x = x.astype(jnp.bfloat16)  # pre-cast outside the kernel: fewer in-kernel ops, half the DMA bytes

    bytes_accessed = (x.size * 2                       # bf16 activations in
                      + (w1p.size + w2p.size + w3p.size) * 2   # bf16 weights
                      + b_packed.size * 4                       # f32 biases
                      + Bp * H * jnp.dtype(out_dtype).itemsize)  # output slab
    cost = pl.CostEstimate(
        flops=2 * Bp * (S * H + H * H + H * H),
        transcendentals=0,
        bytes_accessed=bytes_accessed,
    )

    q_padded = pl.pallas_call(
        qnetwork_kernel,
        out_shape=jax.ShapeDtypeStruct((Bp, H), out_dtype),
        grid=(num_tiles,),
        in_specs=[
            pl.BlockSpec((batch_tile, S), lambda i: (i, 0)),   # x tile (per grid step)
            pl.BlockSpec((S, H), lambda i: (0, 0)),            # W1 (VMEM-resident)
            pl.BlockSpec((H, H), lambda i: (0, 0)),            # W2
            pl.BlockSpec((H, H), lambda i: (0, 0)),            # W3
            pl.BlockSpec((8, H), lambda i: (0, 0)),            # packed biases (b1,b2,b3)
        ],
        out_specs=pl.BlockSpec((batch_tile, H), lambda i: (i, 0)),
        compiler_params=pltpu.CompilerParams(
            dimension_semantics=("parallel",),   # shard batch tiles across TCs on v7x
            vmem_limit_bytes=16 * 1024 * 1024,   # ample; working set well under 2 MiB
        ),
        cost_estimate=cost,
    )(x, w1p, w2p, w3p, b_packed)

    # Slice the lane-padded Q slab down to the real action dimension outside.
    return q_padded[:B, :action_size].astype(jnp.float32)


def init_qnetwork_params(key, state_size, action_size, fc1_units=64, fc2_units=64):
    """nn.Linear-style U(-1/sqrt(fan_in), 1/sqrt(fan_in)) init.

    Weights are (in_features, out_features) (transposed vs. PyTorch), biases
    are (1, out_features). These are the *logical* float32 parameters.
    """
    dims = [(state_size, fc1_units), (fc1_units, fc2_units), (fc2_units, action_size)]
    params = []
    for fan_in, fan_out in dims:
        key, kw, kb = jax.random.split(key, 3)
        bound = 1.0 / math.sqrt(fan_in)
        w = jax.random.uniform(kw, (fan_in, fan_out), jnp.float32, -bound, bound)
        b = jax.random.uniform(kb, (1, fan_out), jnp.float32, -bound, bound)
        params.extend([w, b])
    return tuple(params)


def pad_qnetwork_params(params, lane=LANE):
    """Zero-pad feature dims to the 128-lane width.

    Weights are stored bf16 (MXU operand dtype; halves HBM->VMEM bytes).
    The three biases are packed into ONE (8, lane) f32 slab (rows 0..2), so
    the kernel has a single bias BlockSpec / DMA instead of three.
    """
    w1, b1, w2, b2, w3, b3 = params
    S = w1.shape[0]

    def pad_w(a, rows, cols):
        out = jnp.zeros((rows, cols), jnp.bfloat16)
        return out.at[: a.shape[0], : a.shape[1]].set(a.astype(jnp.bfloat16))

    w1p = pad_w(w1, S, lane)
    w2p = pad_w(w2, lane, lane)
    w3p = pad_w(w3, lane, lane)

    b_packed = jnp.zeros((8, lane), jnp.float32)
    b_packed = b_packed.at[0, : b1.shape[1]].set(b1[0])
    b_packed = b_packed.at[1, : b2.shape[1]].set(b2[0])
    b_packed = b_packed.at[2, : b3.shape[1]].set(b3[0])
    return (w1p, w2p, w3p, b_packed)


def qnetwork_reference(x, params):
    """Pure-JAX float32 reference (matches the PyTorch module's math)."""
    w1, b1, w2, b2, w3, b3 = params
    h1 = jnp.maximum(x @ w1 + b1, 0.0)
    h2 = jnp.maximum(h1 @ w2 + b2, 0.0)
    return h2 @ w3 + b3


def qnetwork_reference_bf16(x, params):
    """Pure-JAX reference with the same bf16-operand / f32-accum numerics as the kernel."""
    w1, b1, w2, b2, w3, b3 = params

    def mm(a, w):
        return jnp.dot(a.astype(jnp.bfloat16), w.astype(jnp.bfloat16),
                       preferred_element_type=jnp.float32)

    h1 = jnp.maximum(mm(x, w1) + b1, 0.0)
    h2 = jnp.maximum(mm(h1, w2) + b2, 0.0)
    return mm(h2, w3) + b3


if __name__ == "__main__":
    # LunarLander-v2: state_size=8, action_size=4.
    state_size, action_size = 8, 4
    fc1_units, fc2_units = 64, 64

    key = jax.random.PRNGKey(0)
    key_p, key_x1, key_x2 = jax.random.split(key, 3)
    params = init_qnetwork_params(key_p, state_size, action_size, fc1_units, fc2_units)
    padded_params = pad_qnetwork_params(params)

    # 1) Replay-buffer-sized batch: 256 rows -> ONE 256-row grid step
    #    (fills the 256-wide MXU M dim on v6e/v7x, no per-step overhead x2).
    batch = 256
    x = jax.random.normal(key_x1, (batch, state_size), jnp.float32)
    q = jax.block_until_ready(qnetwork_forward(x, padded_params, action_size))

    q_ref_bf16 = qnetwork_reference_bf16(x, params)   # kernel-equivalent numerics
    q_ref_f32 = qnetwork_reference(x, params)         # original f32 semantics
    assert q.shape == (batch, action_size)
    assert jnp.allclose(q, q_ref_bf16, atol=1e-3, rtol=1e-3), "mismatch vs bf16 JAX reference"
    assert jnp.allclose(q, q_ref_f32, atol=5e-2, rtol=5e-2), "mismatch vs f32 JAX reference"

    # 2) Tiny action-selection batch (exercises the batch-padding path).
    x_small = jax.random.normal(key_x2, (3, state_size), jnp.float32)
    q_small = jax.block_until_ready(qnetwork_forward(x_small, padded_params, action_size))
    assert q_small.shape == (3, action_size)
    assert jnp.allclose(q_small, qnetwork_reference_bf16(x_small, params),
                        atol=1e-3, rtol=1e-3), "mismatch on small batch"

    print("KERNEL_OK")
</pallas_src>

<mosaic_0001>
module attributes {stable_mosaic.version = 11 : i64} {
  func.func @qnetwork_kernel(%arg0: i32, %arg1: memref<256x8xbf16, #tpu.memory_space<vmem>>, %arg2: memref<8x128xbf16, #tpu.memory_space<vmem>>, %arg3: memref<128x128xbf16, #tpu.memory_space<vmem>>, %arg4: memref<128x128xbf16, #tpu.memory_space<vmem>>, %arg5: memref<8x128xf32, #tpu.memory_space<vmem>>, %arg6: memref<256x128xf32, #tpu.memory_space<vmem>>) attributes {dimension_semantics = [#tpu.dimension_semantics<parallel>], iteration_bounds = array<i64: 1>, scalar_prefetch = 0 : i64, scratch_operands = 0 : i64, tpu.core_type = #tpu.core_type<tc>, window_params = [{transform_indices = @transform_0, window_bounds = array<i64: 256, 8>}, {pipeline_mode = #tpu.pipeline_mode<synchronous>, transform_indices = @transform_1, window_bounds = array<i64: 8, 128>}, {pipeline_mode = #tpu.pipeline_mode<synchronous>, transform_indices = @transform_2, window_bounds = array<i64: 128, 128>}, {pipeline_mode = #tpu.pipeline_mode<synchronous>, transform_indices = @transform_3, window_bounds = array<i64: 128, 128>}, {pipeline_mode = #tpu.pipeline_mode<synchronous>, transform_indices = @transform_4, window_bounds = array<i64: 8, 128>}, {transform_indices = @transform_5, window_bounds = array<i64: 256, 128>}]} {
    %c0 = arith.constant 0 : index
    %c0_0 = arith.constant 0 : index
    %0 = vector.load %arg1[%c0, %c0_0] : memref<256x8xbf16, #tpu.memory_space<vmem>>, vector<256x8xbf16>
    %c0_1 = arith.constant 0 : index
    %c0_2 = arith.constant 0 : index
    %1 = vector.load %arg5[%c0_1, %c0_2] : memref<8x128xf32, #tpu.memory_space<vmem>>, vector<8x128xf32>
    %c0_3 = arith.constant 0 : index
    %c0_4 = arith.constant 0 : index
    %2 = vector.load %arg2[%c0_3, %c0_4] : memref<8x128xbf16, #tpu.memory_space<vmem>>, vector<8x128xbf16>
    %cst = arith.constant dense<0.000000e+00> : vector<256x128xf32>
    %3 = tpu.matmul %0, %2, %cst {dimension_numbers = #tpu.dot_dimension_numbers<[1], [0], [0], [1], [0, 0, 1, 1], [], []>} : vector<256x8xbf16>, vector<8x128xbf16>, vector<256x128xf32> -> vector<256x128xf32>
    %4 = vector.extract_strided_slice %1 {offsets = [0, 0], sizes = [1, 128], strides = [1, 1]} : vector<8x128xf32> to vector<1x128xf32>
    %5 = vector.broadcast %4 : vector<1x128xf32> to vector<256x128xf32>
    %6 = arith.addf %3, %5 : vector<256x128xf32>
    %cst_5 = arith.constant 0.000000e+00 : f32
    %7 = vector.broadcast %cst_5 : f32 to vector<256x128xf32>
    %8 = arith.maximumf %6, %7 : vector<256x128xf32>
    %9 = arith.truncf %8 : vector<256x128xf32> to vector<256x128xbf16>
    %c0_6 = arith.constant 0 : index
    %c0_7 = arith.constant 0 : index
    %10 = vector.load %arg3[%c0_6, %c0_7] : memref<128x128xbf16, #tpu.memory_space<vmem>>, vector<128x128xbf16>
    %cst_8 = arith.constant dense<0.000000e+00> : vector<256x128xf32>
    %11 = tpu.matmul %9, %10, %cst_8 {dimension_numbers = #tpu.dot_dimension_numbers<[1], [0], [0], [1], [0, 0, 1, 1], [], []>} : vector<256x128xbf16>, vector<128x128xbf16>, vector<256x128xf32> -> vector<256x128xf32>
    %12 = vector.extract_strided_slice %1 {offsets = [1, 0], sizes = [1, 128], strides = [1, 1]} : vector<8x128xf32> to vector<1x128xf32>
    %13 = vector.broadcast %12 : vector<1x128xf32> to vector<256x128xf32>
    %14 = arith.addf %11, %13 : vector<256x128xf32>
    %cst_9 = arith.constant 0.000000e+00 : f32
    %15 = vector.broadcast %cst_9 : f32 to vector<256x128xf32>
    %16 = arith.maximumf %14, %15 : vector<256x128xf32>
    %17 = arith.truncf %16 : vector<256x128xf32> to vector<256x128xbf16>
    %c0_10 = arith.constant 0 : index
    %c0_11 = arith.constant 0 : index
    %18 = vector.load %arg4[%c0_10, %c0_11] : memref<128x128xbf16, #tpu.memory_space<vmem>>, vector<128x128xbf16>
    %cst_12 = arith.constant dense<0.000000e+00> : vector<256x128xf32>
    %19 = tpu.matmul %17, %18, %cst_12 {dimension_numbers = #tpu.dot_dimension_numbers<[1], [0], [0], [1], [0, 0, 1, 1], [], []>} : vector<256x128xbf16>, vector<128x128xbf16>, vector<256x128xf32> -> vector<256x128xf32>
    %20 = vector.extract_strided_slice %1 {offsets = [2, 0], sizes = [1, 128], strides = [1, 1]} : vector<8x128xf32> to vector<1x128xf32>
    %21 = vector.broadcast %20 : vector<1x128xf32> to vector<256x128xf32>
    %22 = arith.addf %19, %21 : vector<256x128xf32>
    %c0_13 = arith.constant 0 : index
    %c0_14 = arith.constant 0 : index
    %23 = vector.load %arg6[%c0_13, %c0_14] : memref<256x128xf32, #tpu.memory_space<vmem>>, vector<256x128xf32>
    tpu.vector_store %arg6[%c0_13, %c0_14], %22 {strides = array<i32>} : memref<256x128xf32, #tpu.memory_space<vmem>>, vector<256x128xf32>,
    return
  }
  func.func @transform_0(%arg0: i32) -> (i32, i32) {
    %c0_i32 = arith.constant 0 : i32
    %c0_i32_0 = arith.constant 0 : i32
    return %arg0, %c0_i32 : i32, i32
  }
  func.func @transform_1(%arg0: i32) -> (i32, i32) {
    %c0_i32 = arith.constant 0 : i32
    %c0_i32_0 = arith.constant 0 : i32
    %c0_i32_1 = arith.constant 0 : i32
    return %c0_i32, %c0_i32_0 : i32, i32
  }
  func.func @transform_2(%arg0: i32) -> (i32, i32) {
    %c0_i32 = arith.constant 0 : i32
    %c0_i32_0 = arith.constant 0 : i32
    %c0_i32_1 = arith.constant 0 : i32
    return %c0_i32, %c0_i32_0 : i32, i32
  }
  func.func @transform_3(%arg0: i32) -> (i32, i32) {
    %c0_i32 = arith.constant 0 : i32
    %c0_i32_0 = arith.constant 0 : i32
    %c0_i32_1 = arith.constant 0 : i32
    return %c0_i32, %c0_i32_0 : i32, i32
  }
  func.func @transform_4(%arg0: i32) -> (i32, i32) {
    %c0_i32 = arith.constant 0 : i32
    %c0_i32_0 = arith.constant 0 : i32
    %c0_i32_1 = arith.constant 0 : i32
    return %c0_i32, %c0_i32_0 : i32, i32
  }
  func.func @transform_5(%arg0: i32) -> (i32, i32) {
    %c0_i32 = arith.constant 0 : i32
    %c0_i32_0 = arith.constant 0 : i32
    return %arg0, %c0_i32 : i32, i32
  }
}

</mosaic_0001>

<llo_original>
// kernel: tpu_custom_call.1
$region0: #{tpu_custom_call.1}
  #allocation0 [shape = 'u32[]', space=smem, size = 0x4, offset = 0x4, fixed_abs, tag = 'smem constant byte address 0x4 - core index']
  #allocation1 [shape = 'u32[72,128]{1,0:T(1,128)}', space=vmem, size = 0x9000, scoped, tag = 'internal scratch']
  %s0 = inlined_call_operand.vmem [shape: bf16[256,8], index: 0, kind: input, shape index: {}]
  %s1 = inlined_call_operand.hbm [shape: bf16[8,128], index: 1, kind: input, shape index: {}]
  %s2 = inlined_call_operand.vmem [shape: bf16[128,128], index: 2, kind: input, shape index: {}]
  %s3 = inlined_call_operand.vmem [shape: bf16[128,128], index: 3, kind: input, shape index: {}]
  %s4 = inlined_call_operand.vmem [shape: f32[8,128], index: 4, kind: input, shape index: {}]
  %s5 = inlined_call_operand.hbm [shape: f32[256,128], index: 5, kind: output, shape index: {}]
  %s6 = sld [smem:[#allocation0]]
  $region34: #{tpu_custom_call.1} parent=0
    _
  %s8 = ssub.s32 1, %s6
  %s9 = scalar_select 0, %s8, %s6
  $region1: #{tpu_custom_call.1} parent=0
    #allocation2 [shape = 'u8[2048]{0}', space=vmem, size = 0x800, scoped, tag = 'input window, operand 1, single buffered']
    #allocation3 [shape = 's32[1]{0}', space=sflag, size = 0x4, scoped, tag = 'scoped memory for tpu_custom_call.1']
    #allocation4 [shape = 's32[1]{0}', space=sflag, size = 0x4, scoped, tag = 'scoped memory for tpu_custom_call.1']
    #allocation5 [shape = 'u8[131072]{0}', space=vmem, size = 0x20000, scoped, tag = 'output window, operand 0, single buffered']
    %10 = vsyncpa [#allocation3], 0
    %11 = vsyncpa [#allocation4], 0
    // Predicated region
    $region2: #{tpu_custom_call.1} parent=1 // pred_check
      _
    $region3: #{tpu_custom_call.1} parent=1 // pred_check_branch
      %13 = sbr.rel (0) target = $region5
    $region4: #{tpu_custom_call.1} parent=1 // pred_region
      _
    $region5: #{tpu_custom_call.1} parent=1 // pred_fallthru
      _
    // Predicated region
    $region6: #{tpu_custom_call.1} parent=1 // pred_check
      _
    $region7: #{tpu_custom_call.1} parent=1 // pred_check_branch
      %15 = sbr.rel (0) target = $region9
    $region8: #{tpu_custom_call.1} parent=1 // pred_region
      %17 = vsyncadd [#allocation3], 0
      %s19 = sshll.u32 %s1, 4
      %s20 = int_to_ptr.hbm [resolvable:$true] %s19
      %s21 = sshll.u32 [#allocation2], 4
      %s22 = int_to_ptr.vmem [resolvable:$true] %s21
      %24 = dma.hbm_to_vmem [thread:$0]  %s20, 64, %s22, [#allocation3]
    $region9: #{tpu_custom_call.1} parent=1 // pred_fallthru
      _
    // Predicated region
    $region10: #{tpu_custom_call.1} parent=1 // pred_check
      _
    $region11: #{tpu_custom_call.1} parent=1 // pred_check_branch
      %26 = sbr.rel (0) target = $region13
    $region12: #{tpu_custom_call.1} parent=1 // pred_region
      _
    $region13: #{tpu_custom_call.1} parent=1 // pred_fallthru
      _
    // Predicated region
    $region14: #{tpu_custom_call.1} parent=1 // pred_check
      _
    $region15: #{tpu_custom_call.1} parent=1 // pred_check_branch
      %28 = sbr.rel (0) target = $region17
    $region16: #{tpu_custom_call.1} parent=1 // pred_region
      _
    $region17: #{tpu_custom_call.1} parent=1 // pred_fallthru
      _
    // Predicated region
    $region18: #{tpu_custom_call.1} parent=1 // pred_check
      _
    $region19: #{tpu_custom_call.1} parent=1 // pred_check_branch
      %30 = sbr.rel (0) target = $region21
    $region20: #{tpu_custom_call.1} parent=1 // pred_region
      _
    $region21: #{tpu_custom_call.1} parent=1 // pred_fallthru
      _
    // Predicated region
    $region22: #{tpu_custom_call.1} parent=1 // pred_check
      _
    $region23: #{tpu_custom_call.1} parent=1 // pred_check_branch
      %32 = sbr.rel (0) target = $region25
    $region24: #{tpu_custom_call.1} parent=1 // pred_region
      %34 = dma.done [#allocation3], 64
    $region25: #{tpu_custom_call.1} parent=1 // pred_fallthru
      _
    %v36 = vld [vmem:[%s0] sm:$0xf]
    %v37 = vld [vmem:[%s0 + $0x4] sm:$0xf]
    %v38 = vld [vmem:[%s0 + $0x8] sm:$0xf]
    %v39 = vld [vmem:[%s0 + $0xc] sm:$0xf]
    %v40 = vld [vmem:[%s0 + $0x10] sm:$0xf]
    %v41 = vld [vmem:[%s0 + $0x14] sm:$0xf]
    %v42 = vld [vmem:[%s0 + $0x18] sm:$0xf]
    %v43 = vld [vmem:[%s0 + $0x1c] sm:$0xf]
    %v44 = vld [vmem:[%s0 + $0x20] sm:$0xf]
    %v45 = vld [vmem:[%s0 + $0x24] sm:$0xf]
    %v46 = vld [vmem:[%s0 + $0x28] sm:$0xf]
    %v47 = vld [vmem:[%s0 + $0x2c] sm:$0xf]
    %v48 = vld [vmem:[%s0 + $0x30] sm:$0xf]
    %v49 = vld [vmem:[%s0 + $0x34] sm:$0xf]
    %v50 = vld [vmem:[%s0 + $0x38] sm:$0xf]
    %v51 = vld [vmem:[%s0 + $0x3c] sm:$0xf]
    %v52 = vld [vmem:[%s0 + $0x40] sm:$0xf]
    %v53 = vld [vmem:[%s0 + $0x44] sm:$0xf]
    %v54 = vld [vmem:[%s0 + $0x48] sm:$0xf]
    %v55 = vld [vmem:[%s0 + $0x4c] sm:$0xf]
    %v56 = vld [vmem:[%s0 + $0x50] sm:$0xf]
    %v57 = vld [vmem:[%s0 + $0x54] sm:$0xf]
    %v58 = vld [vmem:[%s0 + $0x58] sm:$0xf]
    %v59 = vld [vmem:[%s0 + $0x5c] sm:$0xf]
    %v60 = vld [vmem:[%s0 + $0x60] sm:$0xf]
    %v61 = vld [vmem:[%s0 + $0x64] sm:$0xf]
    %v62 = vld [vmem:[%s0 + $0x68] sm:$0xf]
    %v63 = vld [vmem:[%s0 + $0x6c] sm:$0xf]
    %v64 = vld [vmem:[%s0 + $0x70] sm:$0xf]
    %v65 = vld [vmem:[%s0 + $0x74] sm:$0xf]
    %v66 = vld [vmem:[%s0 + $0x78] sm:$0xf]
    %v67 = vld [vmem:[%s0 + $0x7c] sm:$0xf]
    %v68 = vld [vmem:[%s4] sm:$0xff]
    %v69 = vld [vmem:[#allocation2] sm:$0xf]
    %v70 = vperm.slane %v68, 0
    %v103 = vunpack.c.l.b16 %v36
    %v104 = vunpack.c.l.b16 %v37
    %v105 = vunpack.c.l.b16 %v38
    %v106 = vunpack.c.l.b16 %v39
    %v107 = vunpack.c.l.b16 %v40
    %v108 = vunpack.c.l.b16 %v41
    %v109 = vunpack.c.l.b16 %v42
    %v110 = vunpack.c.l.b16 %v43
    %v111 = vunpack.c.l.b16 %v44
    %v112 = vunpack.c.l.b16 %v45
    %v113 = vunpack.c.l.b16 %v46
    %v114 = vunpack.c.l.b16 %v47
    %v115 = vunpack.c.l.b16 %v48
    %v116 = vunpack.c.l.b16 %v49
    %v117 = vunpack.c.l.b16 %v50
    %v118 = vunpack.c.l.b16 %v51
    %v119 = vunpack.c.l.b16 %v52
    %v120 = vunpack.c.l.b16 %v53
    %v121 = vunpack.c.l.b16 %v54
    %v122 = vunpack.c.l.b16 %v55
    %v123 = vunpack.c.l.b16 %v56
    %v124 = vunpack.c.l.b16 %v57
    %v125 = vunpack.c.l.b16 %v58
    %v126 = vunpack.c.l.b16 %v59
    %v127 = vunpack.c.l.b16 %v60
    %v128 = vunpack.c.l.b16 %v61
    %v129 = vunpack.c.l.b16 %v62
    %v130 = vunpack.c.l.b16 %v63
    %v131 = vunpack.c.l.b16 %v64
    %v132 = vunpack.c.l.b16 %v65
    %v133 = vunpack.c.l.b16 %v66
    %v134 = vunpack.c.l.b16 %v67
    %v135 = vpack.c.b16 %v104, %v103
    %v136 = vpack.c.b16 %v106, %v105
    %v137 = vpack.c.b16 %v108, %v107
    %v138 = vpack.c.b16 %v110, %v109
    %v139 = vpack.c.b16 %v112, %v111
    %v140 = vpack.c.b16 %v114, %v113
    %v141 = vpack.c.b16 %v116, %v115
    %v142 = vpack.c.b16 %v118, %v117
    %v143 = vpack.c.b16 %v120, %v119
    %v144 = vpack.c.b16 %v122, %v121
    %v145 = vpack.c.b16 %v124, %v123
    %v146 = vpack.c.b16 %v126, %v125
    %v147 = vpack.c.b16 %v128, %v127
    %v148 = vpack.c.b16 %v130, %v129
    %v149 = vpack.c.b16 %v132, %v131
    %v150 = vpack.c.b16 %v134, %v133
    %vm151 = vcmask 64512
    %v153 = vsel %vm151, %v135, 0
    %v156 = vsel %vm151, %v136, 0
    %v159 = vsel %vm151, %v137, 0
    %v162 = vsel %vm151, %v138, 0
    %v165 = vsel %vm151, %v139, 0
    %v168 = vsel %vm151, %v140, 0
    %v171 = vsel %vm151, %v141, 0
    %v174 = vsel %vm151, %v142, 0
    %v177 = vsel %vm151, %v143, 0
    %v180 = vsel %vm151, %v144, 0
    %v183 = vsel %vm151, %v145, 0
    %v186 = vsel %vm151, %v146, 0
    %v189 = vsel %vm151, %v147, 0
    %v192 = vsel %vm151, %v148, 0
    %v195 = vsel %vm151, %v149, 0
    %v198 = vsel %vm151, %v150, 0
    %vm200 = vcmask 1043456
    %v202 = vsel %vm200, %v69, 0
    %204 = vmatpush.bf16.msra.mxu0 0
    %205 = vmatpush.bf16.msra.mxu0 0
    %206 = vmatpush.bf16.msra.mxu0 0
    %207 = vmatpush.bf16.msra.mxu0 0
    %208 = vmatpush.bf16.msra.mxu0 0
    %209 = vmatpush.bf16.msra.mxu0 0
    %210 = vmatpush.bf16.msra.mxu0 0
    %211 = vmatpush.bf16.msra.mxu0 %v202
    %212 = vmatmul.bf16.gmra.mxu0 %v153
    %v213 = vpop.f32.mrf.mxu0
    %v214 = vadd.f32 %v70, %v213
    %v215 = vpop.f32.mrf.mxu0
    %v216 = vadd.f32 %v70, %v215
    %217 = vmatmul.bf16.gmra.mxu0 %v156
    %v218 = vpop.f32.mrf.mxu0
    %v219 = vadd.f32 %v70, %v218
    %v220 = vpop.f32.mrf.mxu0
    %v221 = vadd.f32 %v70, %v220
    %222 = vmatmul.bf16.gmra.mxu0 %v159
    %v223 = vpop.f32.mrf.mxu0
    %v224 = vadd.f32 %v70, %v223
    %v225 = vpop.f32.mrf.mxu0
    %v226 = vadd.f32 %v70, %v225
    %227 = vmatmul.bf16.gmra.mxu0 %v162
    %v228 = vpop.f32.mrf.mxu0
    %v229 = vadd.f32 %v70, %v228
    %v230 = vpop.f32.mrf.mxu0
    %v231 = vadd.f32 %v70, %v230
    %232 = vmatmul.bf16.gmra.mxu0 %v165
    %v233 = vpop.f32.mrf.mxu0
    %v234 = vadd.f32 %v70, %v233
    %v235 = vpop.f32.mrf.mxu0
    %v236 = vadd.f32 %v70, %v235
    %237 = vmatmul.bf16.gmra.mxu0 %v168
    %v238 = vpop.f32.mrf.mxu0
    %v239 = vadd.f32 %v70, %v238
    %v240 = vpop.f32.mrf.mxu0
    %v241 = vadd.f32 %v70, %v240
    %242 = vmatmul.bf16.gmra.mxu0 %v171
    %v243 = vpop.f32.mrf.mxu0
    %v244 = vadd.f32 %v70, %v243
    %v245 = vpop.f32.mrf.mxu0
    %v246 = vadd.f32 %v70, %v245
    %247 = vmatmul.bf16.gmra.mxu0 %v174
    %v248 = vpop.f32.mrf.mxu0
    %v249 = vadd.f32 %v70, %v248
    %v250 = vpop.f32.mrf.mxu0
    %v251 = vadd.f32 %v70, %v250
    %252 = vmatmul.bf16.gmra.mxu0 %v177
    %v253 = vpop.f32.mrf.mxu0
    %v254 = vadd.f32 %v70, %v253
    %v255 = vpop.f32.mrf.mxu0
    %v256 = vadd.f32 %v70, %v255
    %257 = vmatmul.bf16.gmra.mxu0 %v180
    %v258 = vpop.f32.mrf.mxu0
    %v259 = vadd.f32 %v70, %v258
    %v260 = vpop.f32.mrf.mxu0
    %v261 = vadd.f32 %v70, %v260
    %262 = vmatmul.bf16.gmra.mxu0 %v183
    %v263 = vpop.f32.mrf.mxu0
    %v264 = vadd.f32 %v70, %v263
    %v265 = vpop.f32.mrf.mxu0
    %v266 = vadd.f32 %v70, %v265
    %267 = vmatmul.bf16.gmra.mxu0 %v186
    %v268 = vpop.f32.mrf.mxu0
    %v269 = vadd.f32 %v70, %v268
    %v270 = vpop.f32.mrf.mxu0
    %v271 = vadd.f32 %v70, %v270
    %272 = vmatmul.bf16.gmra.mxu0 %v189
    %v273 = vpop.f32.mrf.mxu0
    %v274 = vadd.f32 %v70, %v273
    %v275 = vpop.f32.mrf.mxu0
    %v276 = vadd.f32 %v70, %v275
    %277 = vmatmul.bf16.gmra.mxu0 %v192
    %v278 = vpop.f32.mrf.mxu0
    %v279 = vadd.f32 %v70, %v278
    %v280 = vpop.f32.mrf.mxu0
    %v281 = vadd.f32 %v70, %v280
    %282 = vmatmul.bf16.gmra.mxu0 %v195
    %v283 = vpop.f32.mrf.mxu0
    %v284 = vadd.f32 %v70, %v283
    %v285 = vpop.f32.mrf.mxu0
    %v286 = vadd.f32 %v70, %v285
    %287 = vmatmul.bf16.gmra.mxu0 %v198
    %v288 = vpop.f32.mrf.mxu0
    %v289 = vadd.f32 %v70, %v288
    %v290 = vpop.f32.mrf.mxu0
    %v291 = vadd.f32 %v70, %v290
    %292 = vdwg.mxu0
    %v293 = vmax.f32 %v214, 0.0
    %v294 = vmax.f32 %v216, 0.0
    %v295 = vmax.f32 %v219, 0.0
    %v296 = vmax.f32 %v221, 0.0
    %v297 = vmax.f32 %v224, 0.0
    %v298 = vmax.f32 %v226, 0.0
    %v299 = vmax.f32 %v229, 0.0
    %v300 = vmax.f32 %v231, 0.0
    %v301 = vmax.f32 %v234, 0.0
    %v302 = vmax.f32 %v236, 0.0
    %v303 = vmax.f32 %v239, 0.0
    %v304 = vmax.f32 %v241, 0.0
    %v305 = vmax.f32 %v244, 0.0
    %v306 = vmax.f32 %v246, 0.0
    %v307 = vmax.f32 %v249, 0.0
    %v308 = vmax.f32 %v251, 0.0
    %v309 = vmax.f32 %v254, 0.0
    %v310 = vmax.f32 %v256, 0.0
    %v311 = vmax.f32 %v259, 0.0
    %v312 = vmax.f32 %v261, 0.0
    %v313 = vmax.f32 %v264, 0.0
    %v314 = vmax.f32 %v266, 0.0
    %v315 = vmax.f32 %v269, 0.0
    %v316 = vmax.f32 %v271, 0.0
    %v317 = vmax.f32 %v274, 0.0
    %v318 = vmax.f32 %v276, 0.0
    %v319 = vmax.f32 %v279, 0.0
    %v320 = vmax.f32 %v281, 0.0
    %v321 = vmax.f32 %v284, 0.0
    %v322 = vmax.f32 %v286, 0.0
    %v323 = vmax.f32 %v289, 0.0
    %v324 = vmax.f32 %v291, 0.0
    %v325 = vpack.c.bf16 %v294, %v293
    %v326 = vpack.c.bf16 %v296, %v295
    %v327 = vpack.c.bf16 %v298, %v297
    %v328 = vpack.c.bf16 %v300, %v299
    %v329 = vpack.c.bf16 %v302, %v301
    %v330 = vpack.c.bf16 %v304, %v303
    %v331 = vpack.c.bf16 %v306, %v305
    %v332 = vpack.c.bf16 %v308, %v307
    %v333 = vpack.c.bf16 %v310, %v309
    %v334 = vpack.c.bf16 %v312, %v311
    %v335 = vpack.c.bf16 %v314, %v313
    %v336 = vpack.c.bf16 %v316, %v315
    %v337 = vpack.c.bf16 %v318, %v317
    %v338 = vpack.c.bf16 %v320, %v319
    %v339 = vpack.c.bf16 %v322, %v321
    %v340 = vpack.c.bf16 %v324, %v323
    %v341 = vld [vmem:[%s2] sm:$0xf]
    %v342 = vld [vmem:[%s2 + $0x4] sm:$0xf]
    %v343 = vld [vmem:[%s2 + $0x8] sm:$0xf]
    %v344 = vld [vmem:[%s2 + $0xc] sm:$0xf]
    %v345 = vld [vmem:[%s2 + $0x10] sm:$0xf]
    %v346 = vld [vmem:[%s2 + $0x14] sm:$0xf]
    %v347 = vld [vmem:[%s2 + $0x18] sm:$0xf]
    %v348 = vld [vmem:[%s2 + $0x1c] sm:$0xf]
    %v349 = vld [vmem:[%s2 + $0x20] sm:$0xf]
    %v350 = vld [vmem:[%s2 + $0x24] sm:$0xf]
    %v351 = vld [vmem:[%s2 + $0x28] sm:$0xf]
    %v352 = vld [vmem:[%s2 + $0x2c] sm:$0xf]
    %v353 = vld [vmem:[%s2 + $0x30] sm:$0xf]
    %v354 = vld [vmem:[%s2 + $0x34] sm:$0xf]
    %v355 = vld [vmem:[%s2 + $0x38] sm:$0xf]
    %v356 = vld [vmem:[%s2 + $0x3c] sm:$0xf]
    %v357 = vperm.slane %v68, 1
    %v374 = vunpack.c.l.b16 %v341
    %v375 = vunpack.c.l.b16 %v342
    %v376 = vunpack.c.l.b16 %v343
    %v377 = vunpack.c.l.b16 %v344
    %v378 = vunpack.c.l.b16 %v345
    %v379 = vunpack.c.l.b16 %v346
    %v380 = vunpack.c.l.b16 %v347
    %v381 = vunpack.c.l.b16 %v348
    %v382 = vunpack.c.l.b16 %v349
    %v383 = vunpack.c.l.b16 %v350
    %v384 = vunpack.c.l.b16 %v351
    %v385 = vunpack.c.l.b16 %v352
    %v386 = vunpack.c.l.b16 %v353
    %v387 = vunpack.c.l.b16 %v354
    %v388 = vunpack.c.l.b16 %v355
    %v389 = vunpack.c.l.b16 %v356
    %v390 = vpack.c.b16 %v375, %v374
    %v391 = vpack.c.b16 %v377, %v376
    %v392 = vpack.c.b16 %v379, %v378
    %v393 = vpack.c.b16 %v381, %v380
    %v394 = vpack.c.b16 %v383, %v382
    %v395 = vpack.c.b16 %v385, %v384
    %v396 = vpack.c.b16 %v387, %v386
    %v397 = vpack.c.b16 %v389, %v388
    %406 = vmatpush.bf16.msra.mxu0 %v397
    %407 = vmatpush.bf16.msra.mxu0 %v396
    %408 = vmatpush.bf16.msra.mxu0 %v395
    %409 = vmatpush.bf16.msra.mxu0 %v394
    %410 = vmatpush.bf16.msra.mxu0 %v393
    %411 = vmatpush.bf16.msra.mxu0 %v392
    %412 = vmatpush.bf16.msra.mxu0 %v391
    %413 = vmatpush.bf16.msra.mxu0 %v390
    %414 = vmatmul.bf16.gmra.mxu0 %v325
    %v415 = vpop.f32.mrf.mxu0
    %v416 = vadd.f32 %v357, %v415
    %v417 = vpop.f32.mrf.mxu0
    %v418 = vadd.f32 %v357, %v417
    %419 = vmatmul.bf16.gmra.mxu0 %v326
    %v420 = vpop.f32.mrf.mxu0
    %v421 = vadd.f32 %v357, %v420
    %v422 = vpop.f32.mrf.mxu0
    %v423 = vadd.f32 %v357, %v422
    %424 = vmatmul.bf16.gmra.mxu0 %v327
    %v425 = vpop.f32.mrf.mxu0
    %v426 = vadd.f32 %v357, %v425
    %v427 = vpop.f32.mrf.mxu0
    %v428 = vadd.f32 %v357, %v427
    %429 = vmatmul.bf16.gmra.mxu0 %v328
    %v430 = vpop.f32.mrf.mxu0
    %v431 = vadd.f32 %v357, %v430
    %v432 = vpop.f32.mrf.mxu0
    %v433 = vadd.f32 %v357, %v432
    %434 = vmatmul.bf16.gmra.mxu0 %v329
    %v435 = vpop.f32.mrf.mxu0
    %v436 = vadd.f32 %v357, %v435
    %v437 = vpop.f32.mrf.mxu0
    %v438 = vadd.f32 %v357, %v437
    %439 = vmatmul.bf16.gmra.mxu0 %v330
    %v440 = vpop.f32.mrf.mxu0
    %v441 = vadd.f32 %v357, %v440
    %v442 = vpop.f32.mrf.mxu0
    %v443 = vadd.f32 %v357, %v442
    %444 = vmatmul.bf16.gmra.mxu0 %v331
    %v445 = vpop.f32.mrf.mxu0
    %v446 = vadd.f32 %v357, %v445
    %v447 = vpop.f32.mrf.mxu0
    %v448 = vadd.f32 %v357, %v447
    %449 = vmatmul.bf16.gmra.mxu0 %v332
    %v450 = vpop.f32.mrf.mxu0
    %v451 = vadd.f32 %v357, %v450
    %v452 = vpop.f32.mrf.mxu0
    %v453 = vadd.f32 %v357, %v452
    %454 = vmatmul.bf16.gmra.mxu0 %v333
    %v455 = vpop.f32.mrf.mxu0
    %v456 = vadd.f32 %v357, %v455
    %v457 = vpop.f32.mrf.mxu0
    %v458 = vadd.f32 %v357, %v457
    %459 = vmatmul.bf16.gmra.mxu0 %v334
    %v460 = vpop.f32.mrf.mxu0
    %v461 = vadd.f32 %v357, %v460
    %v462 = vpop.f32.mrf.mxu0
    %v463 = vadd.f32 %v357, %v462
    %464 = vmatmul.bf16.gmra.mxu0 %v335
    %v465 = vpop.f32.mrf.mxu0
    %v466 = vadd.f32 %v357, %v465
    %v467 = vpop.f32.mrf.mxu0
    %v468 = vadd.f32 %v357, %v467
    %469 = vmatmul.bf16.gmra.mxu0 %v336
    %v470 = vpop.f32.mrf.mxu0
    %v471 = vadd.f32 %v357, %v470
    %v472 = vpop.f32.mrf.mxu0
    %v473 = vadd.f32 %v357, %v472
    %474 = vmatmul.bf16.gmra.mxu0 %v337
    %v475 = vpop.f32.mrf.mxu0
    %v476 = vadd.f32 %v357, %v475
    %v477 = vpop.f32.mrf.mxu0
    %v478 = vadd.f32 %v357, %v477
    %479 = vmatmul.bf16.gmra.mxu0 %v338
    %v480 = vpop.f32.mrf.mxu0
    %v481 = vadd.f32 %v357, %v480
    %v482 = vpop.f32.mrf.mxu0
    %v483 = vadd.f32 %v357, %v482
    %484 = vmatmul.bf16.gmra.mxu0 %v339
    %v485 = vpop.f32.mrf.mxu0
    %v486 = vadd.f32 %v357, %v485
    %v487 = vpop.f32.mrf.mxu0
    %v488 = vadd.f32 %v357, %v487
    %489 = vmatmul.bf16.gmra.mxu0 %v340
    %v490 = vpop.f32.mrf.mxu0
    %v491 = vadd.f32 %v357, %v490
    %v492 = vpop.f32.mrf.mxu0
    %v493 = vadd.f32 %v357, %v492
    %494 = vdwg.mxu0
    %v495 = vmax.f32 %v416, 0.0
    %v496 = vmax.f32 %v418, 0.0
    %v497 = vmax.f32 %v421, 0.0
    %v498 = vmax.f32 %v423, 0.0
    %v499 = vmax.f32 %v426, 0.0
    %v500 = vmax.f32 %v428, 0.0
    %v501 = vmax.f32 %v431, 0.0
    %v502 = vmax.f32 %v433, 0.0
    %v503 = vmax.f32 %v436, 0.0
    %v504 = vmax.f32 %v438, 0.0
    %v505 = vmax.f32 %v441, 0.0
    %v506 = vmax.f32 %v443, 0.0
    %v507 = vmax.f32 %v446, 0.0
    %v508 = vmax.f32 %v448, 0.0
    %v509 = vmax.f32 %v451, 0.0
    %v510 = vmax.f32 %v453, 0.0
    %v511 = vmax.f32 %v456, 0.0
    %v512 = vmax.f32 %v458, 0.0
    %v513 = vmax.f32 %v461, 0.0
    %v514 = vmax.f32 %v463, 0.0
    %v515 = vmax.f32 %v466, 0.0
    %v516 = vmax.f32 %v468, 0.0
    %v517 = vmax.f32 %v471, 0.0
    %v518 = vmax.f32 %v473, 0.0
    %v519 = vmax.f32 %v476, 0.0
    %v520 = vmax.f32 %v478, 0.0
    %v521 = vmax.f32 %v481, 0.0
    %v522 = vmax.f32 %v483, 0.0
    %v523 = vmax.f32 %v486, 0.0
    %v524 = vmax.f32 %v488, 0.0
    %v525 = vmax.f32 %v491, 0.0
    %v526 = vmax.f32 %v493, 0.0
    %v527 = vpack.c.bf16 %v496, %v495
    %v528 = vpack.c.bf16 %v498, %v497
    %v529 = vpack.c.bf16 %v500, %v499
    %v530 = vpack.c.bf16 %v502, %v501
    %v531 = vpack.c.bf16 %v504, %v503
    %v532 = vpack.c.bf16 %v506, %v505
    %v533 = vpack.c.bf16 %v508, %v507
    %v534 = vpack.c.bf16 %v510, %v509
    %v535 = vpack.c.bf16 %v512, %v511
    %v536 = vpack.c.bf16 %v514, %v513
    %v537 = vpack.c.bf16 %v516, %v515
    %v538 = vpack.c.bf16 %v518, %v517
    %v539 = vpack.c.bf16 %v520, %v519
    %v540 = vpack.c.bf16 %v522, %v521
    %v541 = vpack.c.bf16 %v524, %v523
    %v542 = vpack.c.bf16 %v526, %v525
    %v543 = vld [vmem:[%s3] sm:$0xf]
    %v544 = vld [vmem:[%s3 + $0x4] sm:$0xf]
    %v545 = vld [vmem:[%s3 + $0x8] sm:$0xf]
    %v546 = vld [vmem:[%s3 + $0xc] sm:$0xf]
    %v547 = vld [vmem:[%s3 + $0x10] sm:$0xf]
    %v548 = vld [vmem:[%s3 + $0x14] sm:$0xf]
    %v549 = vld [vmem:[%s3 + $0x18] sm:$0xf]
    %v550 = vld [vmem:[%s3 + $0x1c] sm:$0xf]
    %v551 = vld [vmem:[%s3 + $0x20] sm:$0xf]
    %v552 = vld [vmem:[%s3 + $0x24] sm:$0xf]
    %v553 = vld [vmem:[%s3 + $0x28] sm:$0xf]
    %v554 = vld [vmem:[%s3 + $0x2c] sm:$0xf]
    %v555 = vld [vmem:[%s3 + $0x30] sm:$0xf]
    %v556 = vld [vmem:[%s3 + $0x34] sm:$0xf]
    %v557 = vld [vmem:[%s3 + $0x38] sm:$0xf]
    %v558 = vld [vmem:[%s3 + $0x3c] sm:$0xf]
    %v559 = vperm.slane %v68, 2
    %v576 = vunpack.c.l.b16 %v543
    %v577 = vunpack.c.l.b16 %v544
    %v578 = vunpack.c.l.b16 %v545
    %v579 = vunpack.c.l.b16 %v546
    %v580 = vunpack.c.l.b16 %v547
    %v581 = vunpack.c.l.b16 %v548
    %v582 = vunpack.c.l.b16 %v549
    %v583 = vunpack.c.l.b16 %v550
    %v584 = vunpack.c.l.b16 %v551
    %v585 = vunpack.c.l.b16 %v552
    %v586 = vunpack.c.l.b16 %v553
    %v587 = vunpack.c.l.b16 %v554
    %v588 = vunpack.c.l.b16 %v555
    %v589 = vunpack.c.l.b16 %v556
    %v590 = vunpack.c.l.b16 %v557
    %v591 = vunpack.c.l.b16 %v558
    %v592 = vpack.c.b16 %v577, %v576
    %v593 = vpack.c.b16 %v579, %v578
    %v594 = vpack.c.b16 %v581, %v580
    %v595 = vpack.c.b16 %v583, %v582
    %v596 = vpack.c.b16 %v585, %v584
    %v597 = vpack.c.b16 %v587, %v586
    %v598 = vpack.c.b16 %v589, %v588
    %v599 = vpack.c.b16 %v591, %v590
    %608 = vmatpush.bf16.msra.mxu0 %v599
    %609 = vmatpush.bf16.msra.mxu0 %v598
    %610 = vmatpush.bf16.msra.mxu0 %v597
    %611 = vmatpush.bf16.msra.mxu0 %v596
    %612 = vmatpush.bf16.msra.mxu0 %v595
    %613 = vmatpush.bf16.msra.mxu0 %v594
    %614 = vmatpush.bf16.msra.mxu0 %v593
    %615 = vmatpush.bf16.msra.mxu0 %v592
    %616 = vmatmul.bf16.gmra.mxu0 %v527
    %v617 = vpop.f32.mrf.mxu0
    %v618 = vadd.f32 %v559, %v617
    %v619 = vpop.f32.mrf.mxu0
    %v620 = vadd.f32 %v559, %v619
    %621 = vmatmul.bf16.gmra.mxu0 %v528
    %v622 = vpop.f32.mrf.mxu0
    %v623 = vadd.f32 %v559, %v622
    %v624 = vpop.f32.mrf.mxu0
    %v625 = vadd.f32 %v559, %v624
    %626 = vmatmul.bf16.gmra.mxu0 %v529
    %v627 = vpop.f32.mrf.mxu0
    %v628 = vadd.f32 %v559, %v627
    %v629 = vpop.f32.mrf.mxu0
    %v630 = vadd.f32 %v559, %v629
    %631 = vmatmul.bf16.gmra.mxu0 %v530
    %v632 = vpop.f32.mrf.mxu0
    %v633 = vadd.f32 %v559, %v632
    %v634 = vpop.f32.mrf.mxu0
    %v635 = vadd.f32 %v559, %v634
    %636 = vmatmul.bf16.gmra.mxu0 %v531
    %v637 = vpop.f32.mrf.mxu0
    %v638 = vadd.f32 %v559, %v637
    %v639 = vpop.f32.mrf.mxu0
    %v640 = vadd.f32 %v559, %v639
    %641 = vmatmul.bf16.gmra.mxu0 %v532
    %v642 = vpop.f32.mrf.mxu0
    %v643 = vadd.f32 %v559, %v642
    %v644 = vpop.f32.mrf.mxu0
    %v645 = vadd.f32 %v559, %v644
    %646 = vmatmul.bf16.gmra.mxu0 %v533
    %v647 = vpop.f32.mrf.mxu0
    %v648 = vadd.f32 %v559, %v647
    %v649 = vpop.f32.mrf.mxu0
    %v650 = vadd.f32 %v559, %v649
    %651 = vmatmul.bf16.gmra.mxu0 %v534
    %v652 = vpop.f32.mrf.mxu0
    %v653 = vadd.f32 %v559, %v652
    %v654 = vpop.f32.mrf.mxu0
    %v655 = vadd.f32 %v559, %v654
    %656 = vmatmul.bf16.gmra.mxu0 %v535
    %v657 = vpop.f32.mrf.mxu0
    %v658 = vadd.f32 %v559, %v657
    %v659 = vpop.f32.mrf.mxu0
    %v660 = vadd.f32 %v559, %v659
    %661 = vmatmul.bf16.gmra.mxu0 %v536
    %v662 = vpop.f32.mrf.mxu0
    %v663 = vadd.f32 %v559, %v662
    %v664 = vpop.f32.mrf.mxu0
    %v665 = vadd.f32 %v559, %v664
    %666 = vmatmul.bf16.gmra.mxu0 %v537
    %v667 = vpop.f32.mrf.mxu0
    %v668 = vadd.f32 %v559, %v667
    %v669 = vpop.f32.mrf.mxu0
    %v670 = vadd.f32 %v559, %v669
    %671 = vmatmul.bf16.gmra.mxu0 %v538
    %v672 = vpop.f32.mrf.mxu0
    %v673 = vadd.f32 %v559, %v672
    %v674 = vpop.f32.mrf.mxu0
    %v675 = vadd.f32 %v559, %v674
    %676 = vmatmul.bf16.gmra.mxu0 %v539
    %v677 = vpop.f32.mrf.mxu0
    %v678 = vadd.f32 %v559, %v677
    %v679 = vpop.f32.mrf.mxu0
    %v680 = vadd.f32 %v559, %v679
    %681 = vmatmul.bf16.gmra.mxu0 %v540
    %v682 = vpop.f32.mrf.mxu0
    %v683 = vadd.f32 %v559, %v682
    %v684 = vpop.f32.mrf.mxu0
    %v685 = vadd.f32 %v559, %v684
    %686 = vmatmul.bf16.gmra.mxu0 %v541
    %v687 = vpop.f32.mrf.mxu0
    %v688 = vadd.f32 %v559, %v687
    %v689 = vpop.f32.mrf.mxu0
    %v690 = vadd.f32 %v559, %v689
    %691 = vmatmul.bf16.gmra.mxu0 %v542
    %v692 = vpop.f32.mrf.mxu0
    %v693 = vadd.f32 %v559, %v692
    %v694 = vpop.f32.mrf.mxu0
    %v695 = vadd.f32 %v559, %v694
    %696 = vdwg.mxu0
    %697 = vst [vmem:[#allocation5] sm:$0xff] %v618
    %698 = vst [vmem:[#allocation5 + $0x8] sm:$0xff] %v620
    %699 = vst [vmem:[#allocation5 + $0x10] sm:$0xff] %v623
    %700 = vst [vmem:[#allocation5 + $0x18] sm:$0xff] %v625
    %701 = vst [vmem:[#allocation5 + $0x20] sm:$0xff] %v628
    %702 = vst [vmem:[#allocation5 + $0x28] sm:$0xff] %v630
    %703 = vst [vmem:[#allocation5 + $0x30] sm:$0xff] %v633
    %704 = vst [vmem:[#allocation5 + $0x38] sm:$0xff] %v635
    %705 = vst [vmem:[#allocation5 + $0x40] sm:$0xff] %v638
    %706 = vst [vmem:[#allocation5 + $0x48] sm:$0xff] %v640
    %707 = vst [vmem:[#allocation5 + $0x50] sm:$0xff] %v643
    %708 = vst [vmem:[#allocation5 + $0x58] sm:$0xff] %v645
    %709 = vst [vmem:[#allocation5 + $0x60] sm:$0xff] %v648
    %710 = vst [vmem:[#allocation5 + $0x68] sm:$0xff] %v650
    %711 = vst [vmem:[#allocation5 + $0x70] sm:$0xff] %v653
    %712 = vst [vmem:[#allocation5 + $0x78] sm:$0xff] %v655
    %713 = vst [vmem:[#allocation5 + $0x80] sm:$0xff] %v658
    %714 = vst [vmem:[#allocation5 + $0x88] sm:$0xff] %v660
    %715 = vst [vmem:[#allocation5 + $0x90] sm:$0xff] %v663
    %716 = vst [vmem:[#allocation5 + $0x98] sm:$0xff] %v665
    %717 = vst [vmem:[#allocation5 + $0xa0] sm:$0xff] %v668
    %718 = vst [vmem:[#allocation5 + $0xa8] sm:$0xff] %v670
    %719 = vst [vmem:[#allocation5 + $0xb0] sm:$0xff] %v673
    %720 = vst [vmem:[#allocation5 + $0xb8] sm:$0xff] %v675
    %721 = vst [vmem:[#allocation5 + $0xc0] sm:$0xff] %v678
    %722 = vst [vmem:[#allocation5 + $0xc8] sm:$0xff] %v680
    %723 = vst [vmem:[#allocation5 + $0xd0] sm:$0xff] %v683
    %724 = vst [vmem:[#allocation5 + $0xd8] sm:$0xff] %v685
    %725 = vst [vmem:[#allocation5 + $0xe0] sm:$0xff] %v688
    %726 = vst [vmem:[#allocation5 + $0xe8] sm:$0xff] %v690
    %727 = vst [vmem:[#allocation5 + $0xf0] sm:$0xff] %v693
    %728 = vst [vmem:[#allocation5 + $0xf8] sm:$0xff] %v695
    // Predicated region
    $region26: #{tpu_custom_call.1} parent=1 // pred_check
      _
    $region27: #{tpu_custom_call.1} parent=1 // pred_check_branch
      %730 = sbr.rel (0) target = $region29
    $region28: #{tpu_custom_call.1} parent=1 // pred_region
      %732 = vsyncadd [#allocation4], 0
      %s733 = sshll.u32 [#allocation5], 4
      %s734 = int_to_ptr.vmem [resolvable:$true] %s733
      %s735 = sshll.u32 %s5, 4
      %s736 = int_to_ptr.hbm [resolvable:$true] %s735
      %741 = dma.vmem_to_hbm [thread:$0]  %s734, 4096, %s736, [#allocation4], 128, 128, 8
    $region29: #{tpu_custom_call.1} parent=1 // pred_fallthru
      _
    // Predicated region
    $region30: #{tpu_custom_call.1} parent=1 // pred_check
      _
    $region31: #{tpu_custom_call.1} parent=1 // pred_check_branch
      %743 = sbr.rel (0) target = $region33
    $region32: #{tpu_custom_call.1} parent=1 // pred_region
      %745 = dma.done [#allocation4], 4096
    $region33: #{tpu_custom_call.1} parent=1 // pred_fallthru
      _
    %746 = vsyncpa [#allocation3], 1
    %747 = vsyncpa [#allocation4], 1

</llo_original>
